<compile_context>
chip_gen: v6e
topology: v6e:2x2x1
jax: 0.10.0
libtpu: 0.0.40
codegen_flags: <defaults>
</compile_context>

<pallas_src>
import math

import jax
import jax.numpy as jnp
import numpy as np
from jax.experimental import pallas as pl
from jax.experimental.pallas import tpu as pltpu

# ----- physical constants from MicroringResonator.__init__ (defaults) -----
RADIUS = 1e-05
CENTER_WL = 1.55e-06
Q_FACTOR = 10000.0
N_GROUP = 4.2
CIRCUMFERENCE = 2.0 * math.pi * RADIUS
FSR = CENTER_WL ** 2 / (N_GROUP * CIRCUMFERENCE)
KERR_COEFF = 2.7e-18
ALPHA = 1.0 - math.pi / Q_FACTOR
TWO_PI = 2.0 * math.pi


def _round_up(x, m):
    return ((x + m - 1) // m) * m


def _vmem_capacity_bytes():
    try:
        return int(pltpu.get_tpu_info().vmem_capacity_bytes)
    except Exception:
        return 64 << 20   # conservative fallback (v7x per-TC VMEM)


def _choose_tiles(batch, width, itemsize):
    """Pick (TB, TW, vmem_limit) so the double-buffered streamed working set
    (2 inputs + 2 outputs) fits comfortably on every TPU generation."""
    cap = _vmem_capacity_bytes()
    budget = min(cap // 4, 32 << 20)         # ~16 MiB on v7x, 32 MiB on v5e/v6e
    per_elem = 4 * 2 * itemsize              # 4 streams x 2 pipeline buffers
    sub = max(8, 32 // itemsize)             # sublane multiple (8 f32 / 16 bf16)

    # Lane tile: keep the full W when it fits with the minimum batch tile,
    # otherwise tile W in multiples of 128 (partial last block masked by Pallas).
    if width <= 128 or sub * width * per_elem <= budget:
        tw = width
    else:
        tw = max(128, ((budget // (sub * per_elem)) // 128) * 128)

    # Batch tile: largest sublane multiple within the budget.
    rows = max(sub, budget // (tw * per_elem))
    tb = max(sub, (rows // sub) * sub)

    # Keep >=2 batch grid steps when there is enough work so the "parallel"
    # axis can shard across both TensorCores on v7x (harmless on v5e/v6e).
    if batch >= 2 * sub:
        tb = min(tb, _round_up(-(-batch // 2), sub))

    if batch < sub:
        tb = batch                           # block dim == full array dim: legal
    else:
        tb = min(tb, _round_up(batch, sub))

    vmem_limit = int(min(cap * 3 // 4, budget + (16 << 20)))
    return tb, tw, vmem_limit


def _adddrop_apply_kernel(x_ref, a_ref, coef_ref, thru_ref, drop_ref):
    """Streaming FMA.  coef_ref rows: 0 = through transmission,
    1 = drop transmission * sqrt(1-k2^2), 2 = sqrt(k2)*sqrt(1-k2^2)."""
    x = x_ref[...].astype(jnp.float32)
    a = a_ref[...].astype(jnp.float32)
    tt = coef_ref[0:1, :]
    dc = coef_ref[1:2, :]
    ac = coef_ref[2:3, :]
    thru_ref[...] = (x * tt).astype(thru_ref.dtype)
    drop_ref[...] = (x * dc + a * ac).astype(drop_ref.dtype)


def _transmission_vectors(wl, phase_shift, coupling_tuning, coupling_2,
                          mean_power):
    """Plain-JAX [W]-sized physics (wavelength-dependent ring response)."""
    kerr_phase = KERR_COEFF * mean_power           # ~1e-19 rad for O(1) power
    ps = jnp.float32(phase_shift) + kerr_phase * 0.1

    detuning = TWO_PI * (wl - CENTER_WL) / FSR
    total_phase = detuning + ps

    kappa = jnp.clip(jnp.float32(coupling_tuning), 0.1, 0.9)
    t = jnp.sqrt(1.0 - kappa * kappa)

    cosp = jnp.cos(total_phase)
    sinp = jnp.sin(total_phase)

    # denominator = 1 - alpha * t * exp(i*phase)
    den_re = 1.0 - ALPHA * t * cosp
    den_im = -ALPHA * t * sinp
    inv_den = 1.0 / (den_re * den_re + den_im * den_im)

    # numerator (through) = t - alpha * exp(i*phase)
    num_re = t - ALPHA * cosp
    num_im = -ALPHA * sinp
    num_abs2 = num_re * num_re + num_im * num_im

    through_trans = num_abs2 * inv_den                   # [W]
    drop_trans = (kappa * kappa) * ALPHA * inv_den       # [W]

    # second (add/drop) coupler
    kappa2 = jnp.clip(jnp.float32(coupling_2), 0.1, 0.9)
    sqrt_k2 = jnp.sqrt(kappa2)
    sqrt_1mk2sq = jnp.sqrt(1.0 - kappa2 * kappa2)

    drop_coeff = drop_trans * sqrt_1mk2sq                # [W]
    add_coeff = sqrt_k2 * sqrt_1mk2sq                    # scalar
    return through_trans, drop_coeff, add_coeff


def add_drop_mrr(input_signal, add_signal, wavelengths,
                 phase_shift=0.0, coupling_tuning=0.3, coupling_2=0.3,
                 mean_input_power=None, stream_dtype=None):
    """Pallas implementation of AddDropMRR.forward.

    mean_input_power: optional scalar mean(|x|^2).  If None, the Kerr phase
    perturbation (below f32 resolution at these constants) is skipped, saving
    a full extra HBM read of the input.
    stream_dtype: dtype used for streaming I/O (defaults to the input dtype);
    in-kernel compute is always f32.
    """
    if stream_dtype is None:
        stream_dtype = input_signal.dtype
    x = input_signal.astype(stream_dtype)
    a = add_signal.astype(stream_dtype)
    wl = wavelengths.astype(jnp.float32)
    B, W = x.shape

    mean_power = (jnp.float32(0.0) if mean_input_power is None
                  else jnp.asarray(mean_input_power, jnp.float32))
    tt, dc, add_c = _transmission_vectors(
        wl, phase_shift, coupling_tuning, coupling_2, mean_power)

    # Single (8, W) f32 coefficient slab: resident in VMEM across batch steps.
    coef = jnp.zeros((8, W), jnp.float32)
    coef = coef.at[0, :].set(tt)
    coef = coef.at[1, :].set(dc)
    coef = coef.at[2, :].set(add_c)

    itemsize = jnp.dtype(stream_dtype).itemsize
    tb, tw, vmem_limit = _choose_tiles(B, W, itemsize)
    grid = (pl.cdiv(B, tb), pl.cdiv(W, tw))

    stream_spec = pl.BlockSpec((tb, tw), lambda i, j: (i, j))
    coef_spec = pl.BlockSpec((8, tw), lambda i, j: (0, j))

    thru, drop = pl.pallas_call(
        _adddrop_apply_kernel,
        out_shape=(
            jax.ShapeDtypeStruct((B, W), stream_dtype),
            jax.ShapeDtypeStruct((B, W), stream_dtype),
        ),
        grid=grid,
        in_specs=[stream_spec, stream_spec, coef_spec],
        out_specs=(stream_spec, stream_spec),
        compiler_params=pltpu.CompilerParams(
            dimension_semantics=("parallel", "parallel"),
            vmem_limit_bytes=vmem_limit),
    )(x, a, coef)

    return {'through': thru, 'drop': drop}


def _reference(x, a, wl, phase_shift=0.0, coupling_tuning=0.3, coupling_2=0.3):
    """Plain-JAX reference matching the PyTorch semantics (single forward)."""
    x = x.astype(jnp.float32)
    a = a.astype(jnp.float32)
    wl = wl.astype(jnp.float32)
    mean_power = jnp.mean(jnp.abs(x) ** 2)
    ps = phase_shift + (KERR_COEFF * mean_power) * 0.1
    detuning = TWO_PI * (wl - CENTER_WL) / FSR
    total_phase = detuning + ps
    kappa = jnp.clip(jnp.float32(coupling_tuning), 0.1, 0.9)
    t = jnp.sqrt(1.0 - kappa ** 2)
    e = jnp.exp(1j * total_phase.astype(jnp.complex64))
    den = 1.0 - ALPHA * t * e
    thru_t = jnp.abs((t - ALPHA * e) / den) ** 2
    drop_t = jnp.abs(kappa * jnp.sqrt(jnp.float32(ALPHA)) / den) ** 2
    thru = x * thru_t[None, :]
    ring_drop = x * drop_t[None, :]
    k2 = jnp.clip(jnp.float32(coupling_2), 0.1, 0.9)
    drop = (ring_drop + a * jnp.sqrt(k2)) * jnp.sqrt(1.0 - k2 ** 2)
    return thru, drop


if __name__ == "__main__":
    key = jax.random.PRNGKey(0)
    k1, k2, k3, k4, k5, k6 = jax.random.split(key, 6)

    # ---- aligned case: batch=8, n_wavelengths=128 ----
    B, W = 8, 128
    x = jax.random.normal(k1, (B, W), dtype=jnp.float32)
    a = jax.random.normal(k2, (B, W), dtype=jnp.float32)
    wl = (CENTER_WL + jnp.linspace(-2e-9, 2e-9, W)).astype(jnp.float32)

    out = add_drop_mrr(x, a, wl)
    jax.block_until_ready(out)
    rt, rd = _reference(x, a, wl)
    np.testing.assert_allclose(np.asarray(out['through']), np.asarray(rt),
                               rtol=1e-4, atol=1e-5)
    np.testing.assert_allclose(np.asarray(out['drop']), np.asarray(rd),
                               rtol=1e-4, atol=1e-5)

    # ---- unaligned, no-padding path: batch=5 (<8), W=96 (not %128) ----
    B2, W2 = 5, 96
    x2 = jax.random.normal(k3, (B2, W2), dtype=jnp.float32)
    a2 = jax.random.normal(k4, (B2, W2), dtype=jnp.float32)
    wl2 = (CENTER_WL + jnp.linspace(-1e-9, 1e-9, W2)).astype(jnp.float32)

    out2 = add_drop_mrr(x2, a2, wl2)
    jax.block_until_ready(out2)
    rt2, rd2 = _reference(x2, a2, wl2)
    np.testing.assert_allclose(np.asarray(out2['through']), np.asarray(rt2),
                               rtol=1e-4, atol=1e-5)
    np.testing.assert_allclose(np.asarray(out2['drop']), np.asarray(rd2),
                               rtol=1e-4, atol=1e-5)

    # ---- partial last batch block + >=2 grid steps: batch=37, W=96 ----
    B3, W3 = 37, 96
    x3 = jax.random.normal(k5, (B3, W3), dtype=jnp.float32)
    a3 = jax.random.normal(k6, (B3, W3), dtype=jnp.float32)
    out3 = add_drop_mrr(x3, a3, wl2)
    jax.block_until_ready(out3)
    rt3, rd3 = _reference(x3, a3, wl2)
    np.testing.assert_allclose(np.asarray(out3['through']), np.asarray(rt3),
                               rtol=1e-4, atol=1e-5)
    np.testing.assert_allclose(np.asarray(out3['drop']), np.asarray(rd3),
                               rtol=1e-4, atol=1e-5)

    # ---- bf16 streaming path (half HBM bytes; compute stays f32) ----
    xb = x.astype(jnp.bfloat16)
    ab = a.astype(jnp.bfloat16)
    outb = add_drop_mrr(xb, ab, wl)
    jax.block_until_ready(outb)
    rtb, rdb = _reference(xb.astype(jnp.float32), ab.astype(jnp.float32), wl)
    np.testing.assert_allclose(
        np.asarray(outb['through'].astype(jnp.float32)), np.asarray(rtb),
        rtol=5e-2, atol=5e-2)
    np.testing.assert_allclose(
        np.asarray(outb['drop'].astype(jnp.float32)), np.asarray(rdb),
        rtol=5e-2, atol=5e-2)

    print("KERNEL_OK")
</pallas_src>

<mosaic_0001>
module attributes {stable_mosaic.version = 11 : i64} {
  func.func @_adddrop_apply_kernel(%arg0: i32, %arg1: i32, %arg2: memref<8x128xf32, #tpu.memory_space<vmem>>, %arg3: memref<8x128xf32, #tpu.memory_space<vmem>>, %arg4: memref<8x128xf32, #tpu.memory_space<vmem>>, %arg5: memref<8x128xf32, #tpu.memory_space<vmem>>, %arg6: memref<8x128xf32, #tpu.memory_space<vmem>>) attributes {dimension_semantics = [#tpu.dimension_semantics<parallel>, #tpu.dimension_semantics<parallel>], iteration_bounds = array<i64: 1, 1>, scalar_prefetch = 0 : i64, scratch_operands = 0 : i64, tpu.core_type = #tpu.core_type<tc>, window_params = [{transform_indices = @transform_0, window_bounds = array<i64: 8, 128>}, {transform_indices = @transform_1, window_bounds = array<i64: 8, 128>}, {transform_indices = @transform_2, window_bounds = array<i64: 8, 128>}, {transform_indices = @transform_3, window_bounds = array<i64: 8, 128>}, {transform_indices = @transform_4, window_bounds = array<i64: 8, 128>}]} {
    %c0 = arith.constant 0 : index
    %c0_0 = arith.constant 0 : index
    %0 = vector.load %arg2[%c0, %c0_0] : memref<8x128xf32, #tpu.memory_space<vmem>>, vector<8x128xf32>
    %c0_1 = arith.constant 0 : index
    %c0_2 = arith.constant 0 : index
    %1 = vector.load %arg3[%c0_1, %c0_2] : memref<8x128xf32, #tpu.memory_space<vmem>>, vector<8x128xf32>
    %c0_3 = arith.constant 0 : index
    %c0_4 = arith.constant 0 : index
    %2 = vector.load %arg4[%c0_3, %c0_4] : memref<8x128xf32, #tpu.memory_space<vmem>>, vector<1x128xf32>
    %c1 = arith.constant 1 : index
    %c0_5 = arith.constant 0 : index
    %3 = vector.load %arg4[%c1, %c0_5] : memref<8x128xf32, #tpu.memory_space<vmem>>, vector<1x128xf32>
    %c2 = arith.constant 2 : index
    %c0_6 = arith.constant 0 : index
    %4 = vector.load %arg4[%c2, %c0_6] : memref<8x128xf32, #tpu.memory_space<vmem>>, vector<1x128xf32>
    %5 = vector.broadcast %2 : vector<1x128xf32> to vector<8x128xf32>
    %6 = arith.mulf %0, %5 : vector<8x128xf32>
    %c0_7 = arith.constant 0 : index
    %c0_8 = arith.constant 0 : index
    %7 = vector.load %arg5[%c0_7, %c0_8] : memref<8x128xf32, #tpu.memory_space<vmem>>, vector<8x128xf32>
    tpu.vector_store %arg5[%c0_7, %c0_8], %6 {strides = array<i32>} : memref<8x128xf32, #tpu.memory_space<vmem>>, vector<8x128xf32>,
    %8 = vector.broadcast %3 : vector<1x128xf32> to vector<8x128xf32>
    %9 = arith.mulf %0, %8 : vector<8x128xf32>
    %10 = vector.broadcast %4 : vector<1x128xf32> to vector<8x128xf32>
    %11 = arith.mulf %1, %10 : vector<8x128xf32>
    %12 = arith.addf %9, %11 : vector<8x128xf32>
    %c0_9 = arith.constant 0 : index
    %c0_10 = arith.constant 0 : index
    %13 = vector.load %arg6[%c0_9, %c0_10] : memref<8x128xf32, #tpu.memory_space<vmem>>, vector<8x128xf32>
    tpu.vector_store %arg6[%c0_9, %c0_10], %12 {strides = array<i32>} : memref<8x128xf32, #tpu.memory_space<vmem>>, vector<8x128xf32>,
    return
  }
  func.func @transform_0(%arg0: i32, %arg1: i32) -> (i32, i32) {
    %c0_i32 = arith.constant 0 : i32
    return %arg0, %arg1 : i32, i32
  }
  func.func @transform_1(%arg0: i32, %arg1: i32) -> (i32, i32) {
    %c0_i32 = arith.constant 0 : i32
    return %arg0, %arg1 : i32, i32
  }
  func.func @transform_2(%arg0: i32, %arg1: i32) -> (i32, i32) {
    %c0_i32 = arith.constant 0 : i32
    %c0_i32_0 = arith.constant 0 : i32
    return %c0_i32, %arg1 : i32, i32
  }
  func.func @transform_3(%arg0: i32, %arg1: i32) -> (i32, i32) {
    %c0_i32 = arith.constant 0 : i32
    return %arg0, %arg1 : i32, i32
  }
  func.func @transform_4(%arg0: i32, %arg1: i32) -> (i32, i32) {
    %c0_i32 = arith.constant 0 : i32
    return %arg0, %arg1 : i32, i32
  }
}

</mosaic_0001>

<llo_original>
// kernel: tpu_custom_call.1
$region0: #{tpu_custom_call.1}
  #allocation0 [shape = 'u32[]', space=smem, size = 0x4, offset = 0x4, fixed_abs, tag = 'smem constant byte address 0x4 - core index']
  #allocation1 [shape = 'u32[144,128]{1,0:T(1,128)}', space=vmem, size = 0x12000, scoped, tag = 'internal scratch']
  %s0 = inlined_call_operand.hbm [shape: f32[8,128], index: 0, kind: input, shape index: {}]
  %s1 = inlined_call_operand.hbm [shape: f32[8,128], index: 1, kind: input, shape index: {}]
  %s2 = inlined_call_operand.hbm [shape: f32[8,128], index: 2, kind: input, shape index: {}]
  %s3 = inlined_call_operand.hbm [shape: f32[8,128], index: 3, kind: output, shape index: {0}]
  %s4 = inlined_call_operand.hbm [shape: f32[8,128], index: 4, kind: output, shape index: {1}]
  %5 = xla_tuple %s3, %s4
  %s6 = sld [smem:[#allocation0]]
  $region42: #{tpu_custom_call.1} parent=0
    _
  %s8 = ssub.s32 1, %s6
  %s9 = scalar_select 0, %s8, %s6
  $region1: #{tpu_custom_call.1} parent=0
    #allocation2 [shape = 'u8[4096]{0}', space=vmem, size = 0x1000, scoped, tag = 'input window, operand 0, single buffered']
    #allocation3 [shape = 's32[1]{0}', space=sflag, size = 0x4, scoped, tag = 'scoped memory for tpu_custom_call.1']
    #allocation4 [shape = 's32[1]{0}', space=sflag, size = 0x4, scoped, tag = 'scoped memory for tpu_custom_call.1']
    #allocation5 [shape = 'u8[4096]{0}', space=vmem, size = 0x1000, scoped, tag = 'input window, operand 1, single buffered']
    #allocation6 [shape = 's32[1]{0}', space=sflag, size = 0x4, scoped, tag = 'scoped memory for tpu_custom_call.1']
    #allocation7 [shape = 'u8[4096]{0}', space=vmem, size = 0x1000, scoped, tag = 'input window, operand 2, single buffered']
    #allocation8 [shape = 'u8[4096]{0}', space=vmem, size = 0x1000, scoped, tag = 'output window, operand 0, single buffered']
    #allocation9 [shape = 'u8[4096]{0}', space=vmem, size = 0x1000, scoped, tag = 'output window, operand 1, single buffered']
    #allocation10 [shape = 's32[1]{0}', space=sflag, size = 0x4, scoped, tag = 'scoped memory for tpu_custom_call.1']
    %10 = vsyncpa [#allocation3], 0
    %11 = vsyncpa [#allocation6], 0
    %12 = vsyncpa [#allocation4], 0
    %13 = vsyncpa [#allocation10], 0
    // Predicated region
    $region2: #{tpu_custom_call.1} parent=1 // pred_check
      _
    $region3: #{tpu_custom_call.1} parent=1 // pred_check_branch
      %15 = sbr.rel (0) target = $region5
    $region4: #{tpu_custom_call.1} parent=1 // pred_region
      %s17 = ssub.s32 128, 128
      %18 = vsyncadd [#allocation3], %s17
      %s20 = sshll.u32 [#allocation2], 4
      %s21 = int_to_ptr.vmem [resolvable:$true] %s20
      %23 = dma.hbm_to_vmem [thread:$0]  %s0, 128, %s21, [#allocation3]
    $region5: #{tpu_custom_call.1} parent=1 // pred_fallthru
      _
    // Predicated region
    $region6: #{tpu_custom_call.1} parent=1 // pred_check
      _
    $region7: #{tpu_custom_call.1} parent=1 // pred_check_branch
      %25 = sbr.rel (0) target = $region9
    $region8: #{tpu_custom_call.1} parent=1 // pred_region
      %s27 = ssub.s32 128, 128
      %28 = vsyncadd [#allocation6], %s27
      %s30 = sshll.u32 [#allocation5], 4
      %s31 = int_to_ptr.vmem [resolvable:$true] %s30
      %33 = dma.hbm_to_vmem [thread:$0]  %s1, 128, %s31, [#allocation6]
    $region9: #{tpu_custom_call.1} parent=1 // pred_fallthru
      _
    // Predicated region
    $region10: #{tpu_custom_call.1} parent=1 // pred_check
      _
    $region11: #{tpu_custom_call.1} parent=1 // pred_check_branch
      %35 = sbr.rel (0) target = $region13
    $region12: #{tpu_custom_call.1} parent=1 // pred_region
      %s37 = ssub.s32 128, 128
      %38 = vsyncadd [#allocation6], %s37
      %s40 = sshll.u32 [#allocation7], 4
      %s41 = int_to_ptr.vmem [resolvable:$true] %s40
      %43 = dma.hbm_to_vmem [thread:$0]  %s2, 128, %s41, [#allocation6]
    $region13: #{tpu_custom_call.1} parent=1 // pred_fallthru
      _
    // Predicated region
    $region14: #{tpu_custom_call.1} parent=1 // pred_check
      _
    $region15: #{tpu_custom_call.1} parent=1 // pred_check_branch
      %45 = sbr.rel (0) target = $region17
    $region16: #{tpu_custom_call.1} parent=1 // pred_region
      %46 = dma.done [#allocation3], 128
    $region17: #{tpu_custom_call.1} parent=1 // pred_fallthru
      _
    // Predicated region
    $region18: #{tpu_custom_call.1} parent=1 // pred_check
      _
    $region19: #{tpu_custom_call.1} parent=1 // pred_check_branch
      %48 = sbr.rel (0) target = $region21
    $region20: #{tpu_custom_call.1} parent=1 // pred_region
      %49 = dma.done [#allocation6], 128
    $region21: #{tpu_custom_call.1} parent=1 // pred_fallthru
      _
    // Predicated region
    $region22: #{tpu_custom_call.1} parent=1 // pred_check
      _
    $region23: #{tpu_custom_call.1} parent=1 // pred_check_branch
      %51 = sbr.rel (0) target = $region25
    $region24: #{tpu_custom_call.1} parent=1 // pred_region
      %52 = dma.done [#allocation6], 128
    $region25: #{tpu_custom_call.1} parent=1 // pred_fallthru
      _
    %v53 = vld [vmem:[#allocation2] sm:$0xff]
    %v54 = vld [vmem:[#allocation5] sm:$0xff]
    %v55 = vld [vmem:[#allocation7] sm:$0x1]
    %v56 = vld [vmem:[#allocation7 + $0x1] sm:$0x1]
    %v57 = vld [vmem:[#allocation7 + $0x2] sm:$0x1]
    %v58 = vlaneseq
    %v59 = vshrl.u32 %v58, 7
    %v60 = vsub.s32 0, %v59
    %v61 = vrot.slane %v55, %v60
    %v62 = vmul.f32 %v53, %v61
    %63 = vst [vmem:[#allocation8] sm:$0xff] %v62
    %v64 = vlaneseq
    %v65 = vshrl.u32 %v64, 7
    %v66 = vsub.s32 0, %v65
    %v67 = vrot.slane %v56, %v66
    %v68 = vmul.f32 %v53, %v67
    %v69 = vlaneseq
    %v70 = vshrl.u32 %v69, 7
    %v71 = vsub.s32 0, %v70
    %v72 = vrot.slane %v57, %v71
    %v73 = vmul.f32 %v54, %v72
    %v74 = vadd.f32 %v68, %v73
    %75 = vst [vmem:[#allocation9] sm:$0xff] %v74
    // Predicated region
    $region26: #{tpu_custom_call.1} parent=1 // pred_check
      _
    $region27: #{tpu_custom_call.1} parent=1 // pred_check_branch
      %77 = sbr.rel (0) target = $region29
    $region28: #{tpu_custom_call.1} parent=1 // pred_region
      %s79 = ssub.s32 128, 128
      %80 = vsyncadd [#allocation4], %s79
      %s82 = sshll.u32 [#allocation8], 4
      %s83 = int_to_ptr.vmem [resolvable:$true] %s82
      %85 = dma.vmem_to_hbm [thread:$0]  %s83, 128, %s3, [#allocation4]
    $region29: #{tpu_custom_call.1} parent=1 // pred_fallthru
      _
    // Predicated region
    $region30: #{tpu_custom_call.1} parent=1 // pred_check
      _
    $region31: #{tpu_custom_call.1} parent=1 // pred_check_branch
      %87 = sbr.rel (0) target = $region33
    $region32: #{tpu_custom_call.1} parent=1 // pred_region
      %s89 = ssub.s32 128, 128
      %90 = vsyncadd [#allocation10], %s89
      %s92 = sshll.u32 [#allocation9], 4
      %s93 = int_to_ptr.vmem [resolvable:$true] %s92
      %95 = dma.vmem_to_hbm [thread:$0]  %s93, 128, %s4, [#allocation10]
    $region33: #{tpu_custom_call.1} parent=1 // pred_fallthru
      _
    // Predicated region
    $region34: #{tpu_custom_call.1} parent=1 // pred_check
      _
    $region35: #{tpu_custom_call.1} parent=1 // pred_check_branch
      %97 = sbr.rel (0) target = $region37
    $region36: #{tpu_custom_call.1} parent=1 // pred_region
      %98 = dma.done [#allocation4], 128
    $region37: #{tpu_custom_call.1} parent=1 // pred_fallthru
      _
    // Predicated region
    $region38: #{tpu_custom_call.1} parent=1 // pred_check
      _
    $region39: #{tpu_custom_call.1} parent=1 // pred_check_branch
      %100 = sbr.rel (0) target = $region41
    $region40: #{tpu_custom_call.1} parent=1 // pred_region
      %101 = dma.done [#allocation10], 128
    $region41: #{tpu_custom_call.1} parent=1 // pred_fallthru
      _
    %102 = vsyncpa [#allocation3], 1
    %103 = vsyncpa [#allocation6], 1
    %104 = vsyncpa [#allocation4], 1
    %105 = vsyncpa [#allocation10], 1

</llo_original>
